<compile_context>
chip_gen: v7x
topology: tpu7x:2x2x1
jax: 0.10.0
libtpu: 0.0.40
codegen_flags: <defaults>
</compile_context>

<pallas_src>
import functools

import jax
import jax.numpy as jnp
from jax.experimental import pallas as pl
from jax.experimental.pallas import tpu as pltpu


# Pad the contraction / embedding dims to 128-lane multiples only if the
# relative byte overhead stays below these fractions; otherwise keep the true
# size (legal: a block dim equal to the full array dim needs no alignment).
_K_PAD_MAX_FRAC = 0.125
_D_PAD_MAX_FRAC = 0.25


def _round_up(v, m):
    return (v + m - 1) // m * m


def _sublane_multiple(dtype):
    # Sub-32-bit dtypes pack along sublanes: 16 rows for bf16, 32 for int8/fp8.
    return max(8, 32 // jnp.dtype(dtype).itemsize)


def _pad_to_lane(n, max_waste_frac):
    """Round n up to a 128-lane multiple iff the padding is cheap; else keep n."""
    up = _round_up(n, 128)
    if up == n or (up - n) <= max_waste_frac * n:
        return up
    return n


_VMEM_PLAN_CACHE = None


def _vmem_plan():
    """Per-generation tile budget / vmem_limit / TM cap, from physical VMEM."""
    global _VMEM_PLAN_CACHE
    if _VMEM_PLAN_CACHE is not None:
        return _VMEM_PLAN_CACHE
    vmem_bytes = None
    try:
        vmem_bytes = getattr(pltpu.get_tpu_info(), "vmem_capacity_bytes", None)
    except Exception:
        vmem_bytes = None
    if vmem_bytes is not None and vmem_bytes >= 100 * 1024 * 1024:
        # v5e / v6e: 128 MiB VMEM -> large tiles amortize the ~0.35 us/step overhead.
        plan = {"budget": 64 * 1024 * 1024, "limit": 96 * 1024 * 1024, "tm_cap": 2048}
    else:
        # v7x (64 MiB per TensorCore) or unknown hardware: stay conservative.
        plan = {"budget": 40 * 1024 * 1024, "limit": 48 * 1024 * 1024, "tm_cap": 1024}
    _VMEM_PLAN_CACHE = plan
    return plan


def _choose_tile_m(M, Kq, Dq, in_bytes, out_bytes, *, budget_bytes, tm_cap,
                   row_mult, requested=None):
    """Pick the M tile: as big as the VMEM budget allows, dtype-aware sublane
    multiple, and (when M allows) giving grid_m >= 2 so both v7x TensorCores
    get work and the pipeline has something to overlap."""
    if M <= row_mult:
        return M                                    # block == full dim -> legal
    if requested is not None:
        # Honor the hint but re-round / clamp so it can't break lowering.
        tm = _round_up(max(int(requested), row_mult), row_mult)
        tm = min(tm, _round_up(M, row_mult))
    else:
        tm = min(tm_cap, _round_up(pl.cdiv(M, 2), row_mult))
    # Residents counted double-buffered (conservative), streamed tiles x2.
    resident = 2 * (Kq * Dq * in_bytes + Dq * 4)
    while tm > row_mult:
        per_tile = 2 * tm * (Kq * in_bytes + Dq * out_bytes)
        if resident + per_tile <= budget_bytes:
            break
        nt = tm // 2
        tm = max(row_mult, nt - nt % row_mult)
    return tm


def _patch_embed_kernel(p_ref, w_ref, b_ref, o_ref):
    # p_ref: (TM, Kq) patch rows     (streamed per grid step)
    # w_ref: (Kq, Dq) projection     (resident: constant index_map)
    # b_ref: (1, Dq)  bias, float32  (resident)
    # o_ref: (TM, Dq) output tile
    acc = jnp.dot(p_ref[...], w_ref[...], preferred_element_type=jnp.float32)
    o_ref[...] = (acc + b_ref[...]).astype(o_ref.dtype)


def _patch_embed_matmul(patches, w_mat, b_row, *, out_dtype, tile_m=None):
    """(M, Kq) @ (Kq, Dq) + bias as a pipelined Pallas matmul."""
    M, Kq = patches.shape
    Dq = w_mat.shape[1]
    plan = _vmem_plan()
    in_bytes = jnp.dtype(patches.dtype).itemsize
    out_bytes = jnp.dtype(out_dtype).itemsize
    row_mult = max(_sublane_multiple(patches.dtype), _sublane_multiple(out_dtype))
    tm = _choose_tile_m(M, Kq, Dq, in_bytes, out_bytes,
                        budget_bytes=plan["budget"], tm_cap=plan["tm_cap"],
                        row_mult=row_mult, requested=tile_m)
    grid_m = pl.cdiv(M, tm)

    return pl.pallas_call(
        _patch_embed_kernel,
        out_shape=jax.ShapeDtypeStruct((M, Dq), out_dtype),
        grid_spec=pltpu.PrefetchScalarGridSpec(
            num_scalar_prefetch=0,
            grid=(grid_m,),
            in_specs=[
                # Streamed patch rows (auto double-buffered by the pipeliner).
                pl.BlockSpec((tm, Kq), lambda i: (i, 0)),
                # Resident weight / bias: constant index_map -> fetched once.
                # TODO(synk): pipeline_mode=pl.Buffered(1) here would reclaim
                # their second buffer (~Kq*Dq bytes); the VMEM budget above
                # conservatively counts both copies instead.
                pl.BlockSpec((Kq, Dq), lambda i: (0, 0)),
                pl.BlockSpec((1, Dq), lambda i: (0, 0)),
            ],
            out_specs=pl.BlockSpec((tm, Dq), lambda i: (i, 0)),
        ),
        compiler_params=pltpu.CompilerParams(
            # No carry across M -> shardable across v7x's two TensorCores.
            dimension_semantics=("parallel",),
            vmem_limit_bytes=plan["limit"],
        ),
    )(patches, w_mat, b_row)


def prepare_patch_embedding_weights(conv_weight, conv_bias, *, compute_dtype=None):
    """Fold Conv2d (D, C, P, P) weights into the kernel's (Kq, Dq) matmul layout.

    Call once (outside the hot path) and feed the result to
    `patch_embedding_prepared` to keep the per-call weight transpose/pad/cast
    off the forward path.
    """
    D, C, P, P2 = conv_weight.shape
    if P != P2:
        raise ValueError("only square patches are supported")
    if compute_dtype is None:
        compute_dtype = conv_weight.dtype
    K = C * P * P
    # (D, C, P, P) -> (K, D), k ordered (c, i, j), exactly how Conv2d with
    # kernel == stride == P flattens its receptive field.
    w_mat = conv_weight.reshape(D, K).T.astype(compute_dtype)
    b_row = conv_bias.reshape(1, D).astype(jnp.float32)   # bias added post-MXU in f32

    Kq = _pad_to_lane(K, _K_PAD_MAX_FRAC)   # exact zero-pad of the contraction dim
    Dq = _pad_to_lane(D, _D_PAD_MAX_FRAC)   # lane-dense output only when cheap
    if Kq != K:
        w_mat = jnp.pad(w_mat, ((0, Kq - K), (0, 0)))
    if Dq != D:
        w_mat = jnp.pad(w_mat, ((0, 0), (0, Dq - D)))
        b_row = jnp.pad(b_row, ((0, 0), (0, Dq - D)))
    return w_mat, b_row


def _patchify(x, patch_size, compute_dtype, k_padded):
    """XLA-side patchify: (B, C, H, W) -> (M, Kq) with k ordered (c, i, j)."""
    B, C, H, W = x.shape
    P = patch_size
    Hp, Wp = H // P, W // P
    M = B * Hp * Wp
    K = C * P * P
    # Cast BEFORE the transpose so the materialized (M, K) intermediate is
    # already in the (narrower) compute dtype — halves this extra HBM pass
    # on the bf16 path.
    x = x.astype(compute_dtype)
    p = x.reshape(B, C, Hp, P, Wp, P)
    p = jnp.transpose(p, (0, 2, 4, 1, 3, 5)).reshape(M, K)
    if k_padded != K:
        p = jnp.pad(p, ((0, 0), (0, k_padded - K)))   # typically fused by XLA
    # TODO(synk): fuse this patchify into the Pallas kernel (grid over (b, ph),
    # stream (C, P, W) strips and rearrange in VMEM) to remove this extra HBM
    # read+write of the activations entirely.
    return p


@functools.partial(
    jax.jit, static_argnames=("patch_size", "compute_dtype", "out_dtype", "tile_m"))
def patch_embedding(x, conv_weight, conv_bias, patch_size, *,
                    compute_dtype=None, out_dtype=None, tile_m=None):
    """ViT patch embedding forward (Conv2d(k=s=P) + 'b d ph pw -> b (ph pw) d').

    x:           (B, C, H, W)   NCHW, like PyTorch
    conv_weight: (D, C, P, P)   PyTorch Conv2d weight layout
    conv_bias:   (D,)
    returns:     (B, N, D) with N = (H // P) * (W // P)

    compute_dtype: dtype streamed through the MXU (accumulation is always f32).
      bfloat16 is the recommended setting on every generation, v5e included
      (its MXU is bf16-native).  Note it quantizes the *inputs*, so expect
      bf16-level deviation from an f32 PyTorch reference.
    out_dtype: defaults to compute_dtype, so the bf16 path writes bf16 too.
    tile_m:    optional M-tile hint; re-rounded/clamped to stay legal and
               within the VMEM budget.
    """
    B, C, H, W = x.shape
    D = conv_weight.shape[0]
    P = patch_size
    if H % P != 0 or W % P != 0:
        raise ValueError(f"H={H}, W={W} must be divisible by patch_size={P}")
    if conv_weight.shape[1:] != (C, P, P):
        raise ValueError(f"conv_weight shape {conv_weight.shape} does not match "
                         f"C={C}, patch_size={P}")
    Hp, Wp = H // P, W // P
    N = Hp * Wp

    if compute_dtype is None:
        compute_dtype = x.dtype
    if out_dtype is None:
        out_dtype = compute_dtype

    w_mat, b_row = prepare_patch_embedding_weights(
        conv_weight, conv_bias, compute_dtype=compute_dtype)
    Kq, Dq = w_mat.shape
    patches = _patchify(x, P, compute_dtype, Kq)
    out = _patch_embed_matmul(patches, w_mat, b_row, out_dtype=out_dtype,
                              tile_m=tile_m)
    if Dq != D:
        out = out[:, :D]
    return out.reshape(B, N, D)


@functools.partial(
    jax.jit, static_argnames=("patch_size", "embed_dim", "out_dtype", "tile_m"))
def patch_embedding_prepared(x, w_mat, b_row, patch_size, embed_dim, *,
                             out_dtype=None, tile_m=None):
    """Same forward, with weights already in the (Kq, Dq) layout from
    `prepare_patch_embedding_weights` (per-call weight prep hoisted away)."""
    B, C, H, W = x.shape
    P = patch_size
    if H % P != 0 or W % P != 0:
        raise ValueError(f"H={H}, W={W} must be divisible by patch_size={P}")
    Hp, Wp = H // P, W // P
    N = Hp * Wp
    D = embed_dim
    K = C * P * P
    Kq, Dq = w_mat.shape
    if Kq < K or Dq < D:
        raise ValueError("prepared weights are smaller than the patch/embed dims")
    compute_dtype = w_mat.dtype
    if out_dtype is None:
        out_dtype = compute_dtype
    patches = _patchify(x, P, compute_dtype, Kq)
    out = _patch_embed_matmul(patches, w_mat, b_row, out_dtype=out_dtype,
                              tile_m=tile_m)
    if Dq != D:
        out = out[:, :D]
    return out.reshape(B, N, D)


if __name__ == "__main__":
    # Small shapes consistent with the module: B=2, C=4, H=W=16, P=4, D=32.
    B, C, H, W = 2, 4, 16, 16
    P = 4
    D = 32

    key = jax.random.PRNGKey(0)
    kx, kw, kb = jax.random.split(key, 3)

    x = jax.random.normal(kx, (B, C, H, W), dtype=jnp.float32)
    conv_weight = jax.random.normal(kw, (D, C, P, P), dtype=jnp.float32) * 0.02
    conv_bias = jax.random.normal(kb, (D,), dtype=jnp.float32) * 0.02

    # Reference: same semantics as the PyTorch module (Conv2d + rearrange).
    ref = jax.lax.conv_general_dilated(
        x, conv_weight, window_strides=(P, P), padding="VALID",
        dimension_numbers=("NCHW", "OIHW", "NCHW"),
    ) + conv_bias.reshape(1, D, 1, 1)
    ref = jnp.transpose(ref.reshape(B, D, -1), (0, 2, 1))   # b d ph pw -> b (ph pw) d

    N = (H // P) * (W // P)

    # f32 path: matches the module's numerics.
    out = patch_embedding(x, conv_weight, conv_bias, patch_size=P)
    out = jax.block_until_ready(out)
    assert out.shape == (B, N, D)
    assert jnp.allclose(out, ref, atol=1e-4, rtol=1e-4)

    # Hoisted-weight (inference) path.
    w_mat, b_row = prepare_patch_embedding_weights(conv_weight, conv_bias,
                                                   compute_dtype=jnp.float32)
    out_prep = patch_embedding_prepared(x, w_mat, b_row, patch_size=P, embed_dim=D)
    out_prep = jax.block_until_ready(out_prep)
    assert out_prep.shape == (B, N, D)
    assert jnp.allclose(out_prep, ref, atol=1e-4, rtol=1e-4)

    # bf16 compute + bf16 output — the recommended mode on v5e/v6e/v7x.
    # Tolerance reflects bf16 input/weight quantization, not a kernel bug.
    out_bf16 = patch_embedding(x, conv_weight, conv_bias, patch_size=P,
                               compute_dtype=jnp.bfloat16)
    out_bf16 = jax.block_until_ready(out_bf16)
    assert out_bf16.shape == (B, N, D)
    assert out_bf16.dtype == jnp.bfloat16
    assert jnp.allclose(out_bf16.astype(jnp.float32), ref, atol=3e-2, rtol=3e-2)

    print("KERNEL_OK")
</pallas_src>

<mosaic_0001>
module attributes {stable_mosaic.version = 11 : i64} {
  func.func @_patch_embed_kernel(%arg0: i32, %arg1: memref<16x64xf32, #tpu.memory_space<vmem>>, %arg2: memref<64x32xf32, #tpu.memory_space<vmem>>, %arg3: memref<1x32xf32, #tpu.memory_space<vmem>>, %arg4: memref<16x32xf32, #tpu.memory_space<vmem>>) attributes {dimension_semantics = [#tpu.dimension_semantics<parallel>], iteration_bounds = array<i64: 2>, scalar_prefetch = 0 : i64, scratch_operands = 0 : i64, tpu.core_type = #tpu.core_type<tc>, window_params = [{transform_indices = @transform_0, window_bounds = array<i64: 16, 64>}, {pipeline_mode = #tpu.pipeline_mode<synchronous>, transform_indices = @transform_1, window_bounds = array<i64: 64, 32>}, {pipeline_mode = #tpu.pipeline_mode<synchronous>, transform_indices = @transform_2, window_bounds = array<i64: 1, 32>}, {transform_indices = @transform_3, window_bounds = array<i64: 16, 32>}]} {
    %c0 = arith.constant 0 : index
    %c0_0 = arith.constant 0 : index
    %0 = vector.load %arg1[%c0, %c0_0] : memref<16x64xf32, #tpu.memory_space<vmem>>, vector<16x64xf32>
    %c0_1 = arith.constant 0 : index
    %c0_2 = arith.constant 0 : index
    %1 = vector.load %arg2[%c0_1, %c0_2] : memref<64x32xf32, #tpu.memory_space<vmem>>, vector<64x32xf32>
    %cst = arith.constant dense<0.000000e+00> : vector<16x32xf32>
    %2 = tpu.matmul %0, %1, %cst {dimension_numbers = #tpu.dot_dimension_numbers<[1], [0], [0], [1], [0, 0, 1, 1], [], []>} : vector<16x64xf32>, vector<64x32xf32>, vector<16x32xf32> -> vector<16x32xf32>
    %c0_3 = arith.constant 0 : index
    %c0_4 = arith.constant 0 : index
    %3 = vector.load %arg3[%c0_3, %c0_4] : memref<1x32xf32, #tpu.memory_space<vmem>>, vector<1x32xf32>
    %4 = vector.broadcast %3 : vector<1x32xf32> to vector<16x32xf32>
    %5 = arith.addf %2, %4 : vector<16x32xf32>
    %c0_5 = arith.constant 0 : index
    %c0_6 = arith.constant 0 : index
    %6 = vector.load %arg4[%c0_5, %c0_6] : memref<16x32xf32, #tpu.memory_space<vmem>>, vector<16x32xf32>
    tpu.vector_store %arg4[%c0_5, %c0_6], %5 {strides = array<i32>} : memref<16x32xf32, #tpu.memory_space<vmem>>, vector<16x32xf32>,
    return
  }
  func.func @transform_0(%arg0: i32) -> (i32, i32) {
    %c0_i32 = arith.constant 0 : i32
    %c0_i32_0 = arith.constant 0 : i32
    return %arg0, %c0_i32 : i32, i32
  }
  func.func @transform_1(%arg0: i32) -> (i32, i32) {
    %c0_i32 = arith.constant 0 : i32
    %c0_i32_0 = arith.constant 0 : i32
    %c0_i32_1 = arith.constant 0 : i32
    return %c0_i32, %c0_i32_0 : i32, i32
  }
  func.func @transform_2(%arg0: i32) -> (i32, i32) {
    %c0_i32 = arith.constant 0 : i32
    %c0_i32_0 = arith.constant 0 : i32
    %c0_i32_1 = arith.constant 0 : i32
    return %c0_i32, %c0_i32_0 : i32, i32
  }
  func.func @transform_3(%arg0: i32) -> (i32, i32) {
    %c0_i32 = arith.constant 0 : i32
    %c0_i32_0 = arith.constant 0 : i32
    return %arg0, %c0_i32 : i32, i32
  }
}

</mosaic_0001>

<llo_original>
// kernel: patch_embedding.1
$region0: #{patch_embedding.1}
  #allocation0 [shape = 'u32[]', space=smem, size = 0x4, offset = 0x4, fixed_abs, tag = 'smem constant byte address 0x4 - core index']
  #allocation1 [shape = 'u32[144,128]{1,0:T(1,128)}', space=vmem, size = 0x12000, scoped, tag = 'internal scratch']
  %s0 = inlined_call_operand.vmem [shape: f32[32,64], index: 0, kind: input, shape index: {}]
  %s1 = inlined_call_operand.vmem [shape: f32[64,32], index: 1, kind: input, shape index: {}]
  %s2 = inlined_call_operand.vmem [shape: f32[1,32], index: 2, kind: input, shape index: {}]
  %s3 = inlined_call_operand.hbm [shape: f32[32,32], index: 3, kind: output, shape index: {}]
  %s4 = sld [smem:[#allocation0]]
  $region45: #{patch_embedding.1} parent=0
    _
  %s6 = ssub.s32 1, %s4
  %s7 = scalar_select 0, %s6, %s4
  $region1: #{patch_embedding.1} parent=0
    #allocation2 [shape = 'u8[16384]{0}', space=vmem, size = 0x4000, scoped, tag = 'output window, operand 0']
    #allocation3 [shape = 's32[2]{0}', space=sflag, size = 0x8, scoped, tag = 'scoped memory for patch_embedding.1']
    %8 = vsyncpa [#allocation3], 0
    %s9 = scalar_lea.sflag [#allocation3], 1
    %10 = vsyncpa %s9, 0
    loop: start=0, step=1, limit=4
    $region2: #{patch_embedding.1} parent=1 // loop_pre_header
      _
    $region3: #{patch_embedding.1} parent=1 // loop_header
      %s12 = sphi 0, %s16
      %p13 = scmp.ge.s32.totalorder %s12, 4
      %s22 = sphi 0, %s24
      %s25 = sphi 0, %s22
      %s26 = sphi 0, %s25
      %s42 = sphi 0, %s26
      %s46 = sphi 0, %s46
      %s48 = sphi 0, %s46
      %s49 = sphi 0, %s48
      %s63 = sphi 0, %s49
      %s67 = sphi 0, %s67
      %s69 = sphi 0, %s67
      %s70 = sphi 0, %s69
      %s84 = sphi 0, %s70
      %s90 = sphi 0, %s92
      %s93 = sphi 0, %s90
      %s94 = sphi 0, %s93
      %s110 = sphi 0, %s94
    $region4: #{patch_embedding.1} parent=1 // loop_header_branch
      %15 = sbr.rel (%p13) target = $region8
    $region5: #{patch_embedding.1} parent=1 // loop_body
      %s17 = ssub.s32 %s12, 1
      %s18 = ssub.s32 %s12, 2
      %s19 = sadd.s32 %s12, 1
      %s20 = ssub.s32 %s12, %s19
      %p21 = scmp.eq.s32.totalorder %s20, 0
      %s23 = sadd.s32 %s22, 1
      %s24 = scalar_select %p21, %s22, %s23
      %p27 = pneg %p21
      %p28 = scmp.eq.s32.totalorder %s12, 1
      %p29 = por %p27, %p28
      %p30 = scmp.ne.s32.totalorder %s22, %s25
      %p31 = scmp.eq.s32.totalorder %s12, 0
      %p32 = por %p30, %p31
      %p33 = scmp.ne.s32.totalorder %s22, %s25
      %p34 = scmp.eq.s32.totalorder %s17, 1
      %p35 = por %p33, %p34
      %p36 = scmp.ne.s32.totalorder %s25, %s26
      %p37 = scmp.eq.s32.totalorder %s17, 0
      %p38 = por %p36, %p37
      %p39 = scmp.ne.s32.totalorder %s25, %s26
      %p40 = scmp.eq.s32.totalorder %s18, 1
      %p41 = por %p39, %p40
      %p43 = scmp.ne.s32.totalorder %s26, %s42
      %p44 = scmp.eq.s32.totalorder %s18, 0
      %p45 = por %p43, %p44
      %s47 = sadd.s32 %s46, 1
      %p50 = scmp.eq.s32.totalorder %s12, 1
      %p51 = scmp.ne.s32.totalorder %s46, %s48
      %p52 = scmp.eq.s32.totalorder %s12, 0
      %p53 = por %p51, %p52
      %p54 = scmp.ne.s32.totalorder %s46, %s48
      %p55 = scmp.eq.s32.totalorder %s17, 1
      %p56 = por %p54, %p55
      %p57 = scmp.ne.s32.totalorder %s48, %s49
      %p58 = scmp.eq.s32.totalorder %s17, 0
      %p59 = por %p57, %p58
      %p60 = scmp.ne.s32.totalorder %s48, %s49
      %p61 = scmp.eq.s32.totalorder %s18, 1
      %p62 = por %p60, %p61
      %p64 = scmp.ne.s32.totalorder %s49, %s63
      %p65 = scmp.eq.s32.totalorder %s18, 0
      %p66 = por %p64, %p65
      %s68 = sadd.s32 %s67, 1
      %p71 = scmp.eq.s32.totalorder %s12, 1
      %p72 = scmp.ne.s32.totalorder %s67, %s69
      %p73 = scmp.eq.s32.totalorder %s12, 0
      %p74 = por %p72, %p73
      %p75 = scmp.ne.s32.totalorder %s67, %s69
      %p76 = scmp.eq.s32.totalorder %s17, 1
      %p77 = por %p75, %p76
      %p78 = scmp.ne.s32.totalorder %s69, %s70
      %p79 = scmp.eq.s32.totalorder %s17, 0
      %p80 = por %p78, %p79
      %p81 = scmp.ne.s32.totalorder %s69, %s70
      %p82 = scmp.eq.s32.totalorder %s18, 1
      %p83 = por %p81, %p82
      %p85 = scmp.ne.s32.totalorder %s70, %s84
      %p86 = scmp.eq.s32.totalorder %s18, 0
      %p87 = por %p85, %p86
      %s88 = ssub.s32 %s12, %s19
      %p89 = scmp.eq.s32.totalorder %s88, 0
      %s91 = sadd.s32 %s90, 1
      %s92 = scalar_select %p89, %s90, %s91
      %p95 = pneg %p89
      %p96 = scmp.eq.s32.totalorder %s12, 1
      %p97 = por %p95, %p96
      %p98 = scmp.ne.s32.totalorder %s90, %s93
      %p99 = scmp.eq.s32.totalorder %s12, 0
      %p100 = por %p98, %p99
      %p101 = scmp.ne.s32.totalorder %s90, %s93
      %p102 = scmp.eq.s32.totalorder %s17, 1
      %p103 = por %p101, %p102
      %p104 = scmp.ne.s32.totalorder %s93, %s94
      %p105 = scmp.eq.s32.totalorder %s17, 0
      %p106 = por %p104, %p105
      %p107 = scmp.ne.s32.totalorder %s93, %s94
      %p108 = scmp.eq.s32.totalorder %s18, 1
      %p109 = por %p107, %p108
      %p111 = scmp.ne.s32.totalorder %s94, %s110
      %p112 = scmp.eq.s32.totalorder %s18, 0
      %p113 = por %p111, %p112
      %p114 = scmp.le.s32.totalorder 1, %s12
      %p115 = scmp.lt.s32.totalorder %s12, 3
      %p116 = pnand %p114, %p115
      %p117 = pneg %p116
      // Predicated region
      $region9: #{patch_embedding.1} parent=5 // pred_check
        _
      $region10: #{patch_embedding.1} parent=5 // pred_check_branch
        %119 = sbr.rel (%p116) target = $region12
      $region11: #{patch_embedding.1} parent=5 // pred_region
        %s120 = ssub.s32 %s12, 1
        // Predicated region
        $region13: #{patch_embedding.1} parent=11 // pred_check
          %p121 = pneg %p59
        $region14: #{patch_embedding.1} parent=11 // pred_check_branch
          %123 = sbr.rel (%p121) target = $region16
        $region15: #{patch_embedding.1} parent=11 // pred_region
          _
        $region16: #{patch_embedding.1} parent=11 // pred_fallthru
          _
        // Predicated region
        $region17: #{patch_embedding.1} parent=11 // pred_check
          %p124 = pneg %p80
        $region18: #{patch_embedding.1} parent=11 // pred_check_branch
          %126 = sbr.rel (%p124) target = $region20
        $region19: #{patch_embedding.1} parent=11 // pred_region
          _
        $region20: #{patch_embedding.1} parent=11 // pred_fallthru
          _
      $region12: #{patch_embedding.1} parent=5 // pred_fallthru
        _
      %p127 = scmp.lt.s32.totalorder %s12, 2
      // Predicated region
      $region21: #{patch_embedding.1} parent=5 // pred_check
        %p128 = pneg %p127
      $region22: #{patch_embedding.1} parent=5 // pred_check_branch
        %130 = sbr.rel (%p128) target = $region24
      $region23: #{patch_embedding.1} parent=5 // pred_region
        // Predicated region
        $region25: #{patch_embedding.1} parent=23 // pred_check
          %p131 = pneg %p32
        $region26: #{patch_embedding.1} parent=23 // pred_check_branch
          %133 = sbr.rel (%p131) target = $region28
        $region27: #{patch_embedding.1} parent=23 // pred_region
          %s134 = smul.u32 2, %s12
          %p135 = scmp.lt.s32.totalorder %s134, 3
          %s136 = scalar_select %p135, %s134, 3
          %s137 = smul.addr %s136, 8
          %s138 = scalar_lea.vmem %s0, %s137
          %s139 = smul.u32 2, %s12
        $region28: #{patch_embedding.1} parent=23 // pred_fallthru
          _
      $region24: #{patch_embedding.1} parent=5 // pred_fallthru
        _
      %p140 = scmp.le.s32.totalorder 1, %s12
      %p141 = scmp.lt.s32.totalorder %s12, 3
      %p142 = pnand %p140, %p141
      %p143 = pneg %p142
      // Predicated region
      $region29: #{patch_embedding.1} parent=5 // pred_check
        _
      $region30: #{patch_embedding.1} parent=5 // pred_check_branch
        %145 = sbr.rel (%p142) target = $region32
      $region31: #{patch_embedding.1} parent=5 // pred_region
        %s146 = ssub.s32 %s12, 1
        %s147 = smul.u32 2, %s17
        %p148 = scmp.lt.s32.totalorder %s147, 3
        %s149 = scalar_select %p148, %s147, 3
        %s150 = smul.addr %s149, 8
        %s151 = scalar_lea.vmem %s0, %s150
        %p152 = pneg %p38
        %p153 = pneg %p35
        %p154 = pneg %p59
        %p155 = pneg %p56
        %p156 = pneg %p80
        %p157 = pneg %p77
        %p158 = pneg %p106
        %p159 = pneg %p103
        %s160 = sand.u32 %s93, 1
        %s161 = scalar_lea.sflag [#allocation3], %s160
        %s162 = sand.u32 %s93, 1
        %s163 = smul.addr %s162, 16
        %s164 = scalar_lea.vmem [#allocation2], %s163
        %s165 = smul.u32 2, %s17
        %p166 = scmp.lt.s32.totalorder %s165, 3
        %s167 = scalar_select %p166, %s165, 3
        %s168 = smul.addr %s167, 8
        %s169 = scalar_lea.vmem %s0, %s168
        %s170 = smul.u32 2, %s17
        %s171 = smul.u32 2, %s17
        %v172 = vld [vmem:[%s169] sm:$0xff]
        %v173 = vld [vmem:[%s169 + $0x8] sm:$0xff]
        %v174 = vld [vmem:[%s1] sm:$0xff]
        %v175 = vld [vmem:[%s1 + $0x8] sm:$0xff]
        %v176 = vld [vmem:[%s1 + $0x10] sm:$0xff]
        %v177 = vld [vmem:[%s1 + $0x18] sm:$0xff]
        %v178 = vld [vmem:[%s1 + $0x20] sm:$0xff]
        %v179 = vld [vmem:[%s1 + $0x28] sm:$0xff]
        %v180 = vld [vmem:[%s1 + $0x30] sm:$0xff]
        %v181 = vld [vmem:[%s1 + $0x38] sm:$0xff]
        %v182 = vld [vmem:[%s2] sm:$0x1]
        %v184 = vlaneseq
        %v185 = vshrl.u32 %v184, 7
        %v186 = vsub.s32 0, %v185
        %v187 = vrot.slane %v182, %v186
        %vm189 = vcmask 523264
        %v191 = vsel %vm189, %v172, 0
        %v194 = vsel %vm189, %v173, 0
        %196 = vmatprep.subr.mxu0 0.0
        %197 = vmatpush1.msra.mxu0 %v174
        %198 = vmatprep.subr.mxu0 0.0
        %199 = vmatpush1.msra.mxu0 %v175
        %200 = vmatprep.subr.mxu0 0.0
        %201 = vmatpush1.msra.mxu0 %v176
        %202 = vmatprep.subr.mxu0 0.0
        %203 = vmatpush1.msra.mxu0 %v177
        %204 = vmatprep.subr.mxu0 0.0
        %205 = vmatpush1.msra.mxu0 %v178
        %206 = vmatprep.subr.mxu0 0.0
        %207 = vmatpush1.msra.mxu0 %v179
        %208 = vmatprep.subr.mxu0 0.0
        %209 = vmatpush1.msra.mxu0 %v180
        %210 = vmatprep.subr.mxu0 0.0
        %211 = vmatpush1.msra.mxu0 %v181
        %212 = vmatprep.subr.mxu0 0.0
        %213 = vmatpush1.msra.mxu0 0.0
        %214 = vmatprep.subr.mxu0 0.0
        %215 = vmatpush1.msra.mxu0 0.0
        %216 = vmatprep.subr.mxu0 0.0
        %217 = vmatpush1.msra.mxu0 0.0
        %218 = vmatprep.subr.mxu0 0.0
        %219 = vmatpush1.msra.mxu0 0.0
        %220 = vmatprep.subr.mxu0 0.0
        %221 = vmatpush1.msra.mxu0 0.0
        %222 = vmatprep.subr.mxu0 0.0
        %223 = vmatpush1.msra.mxu0 0.0
        %224 = vmatprep.subr.mxu0 0.0
        %225 = vmatpush1.msra.mxu0 0.0
        %226 = vmatprep.subr.mxu0 0.0
        %227 = vmatpush1.msra.mxu0 0.0
        %228 = vmatprep.subr.mxu0 0.0
        %229 = vmatpush1.msra.mxu0 0.0
        %230 = vmatprep.subr.mxu0 0.0
        %231 = vmatpush1.msra.mxu0 0.0
        %232 = vmatprep.subr.mxu0 0.0
        %233 = vmatpush1.msra.mxu0 0.0
        %234 = vmatprep.subr.mxu0 0.0
        %235 = vmatpush1.msra.mxu0 0.0
        %236 = vmatprep.subr.mxu0 0.0
        %237 = vmatpush1.msra.mxu0 0.0
        %238 = vmatprep.subr.mxu0 0.0
        %239 = vmatpush1.msra.mxu0 0.0
        %240 = vmatprep.subr.mxu0 0.0
        %241 = vmatpush1.msra.mxu0 0.0
        %242 = vmatprep.subr.mxu0 0.0
        %243 = vmatpush1.msra.mxu0 0.0
        %244 = vmatprep.subr.mxu0 0.0
        %245 = vmatpush1.msra.mxu0 0.0
        %246 = vmatprep.subr.mxu0 0.0
        %247 = vmatpush1.msra.mxu0 0.0
        %248 = vmatprep.subr.mxu0 0.0
        %249 = vmatpush1.msra.mxu0 0.0
        %250 = vmatprep.subr.mxu0 0.0
        %251 = vmatpush1.msra.mxu0 0.0
        %252 = vmatprep.subr.mxu0 0.0
        %253 = vmatpush1.msra.mxu0 0.0
        %254 = vmatprep.subr.mxu0 0.0
        %255 = vmatpush1.msra.mxu0 0.0
        %256 = vmatprep.subr.mxu0 0.0
        %257 = vmatpush1.msra.mxu0 0.0
        %258 = vmatprep.subr.mxu0 0.0
        %259 = vmatpush1.msra.mxu0 0.0
        %260 = vmatprep.mubr.f32.mxu0 0.0
        %261 = vmatmul.mubr.f32.gmra.mrb[0].mxu0 %v191
        %v262 = vpop.f32.mrb[0].mxu0
        %v263 = vadd.f32 %v187, %v262
        %v264 = vpop.f32.mrb[0].mxu0
        %265 = vmatprep.mubr.f32.mxu0 0.0
        %266 = vmatmul.mubr.f32.gmra.mrb[0].mxu0 %v194
        %v267 = vpop.f32.mrb[0].mxu0
        %v268 = vadd.f32 %v187, %v267
        %v269 = vpop.f32.mrb[0].mxu0
        %270 = vdwg.mxu0
        %vm271 = vcmask 261120
        %272 = vst.msk [vmem:[%s164] sm:$0xff] %vm271, %v263
        %273 = vst.msk [vmem:[%s164 + $0x8] sm:$0xff] %vm271, %v268
        %s274 = sand.u32 %s93, 1
        %s275 = scalar_lea.sflag [#allocation3], %s274
        %s276 = sand.u32 %s93, 1
        %s277 = smul.addr %s276, 16
        %s278 = scalar_lea.vmem [#allocation2], %s277
        // Predicated region
        $region33: #{patch_embedding.1} parent=31 // pred_check
          %p279 = pneg %p103
        $region34: #{patch_embedding.1} parent=31 // pred_check_branch
          %281 = sbr.rel (%p279) target = $region36
        $region35: #{patch_embedding.1} parent=31 // pred_region
          %s282 = smul.u32 2, %s17
          %s284 = ssub.s32 256, 256
          %285 = vsyncadd %s275, %s284
          %s286 = smul.addr %s282, 128
          %s287 = scalar_lea.hbm %s3, %s286
          %s288 = sshll.u32 %s278, 4
          %s289 = int_to_ptr.vmem [resolvable:$true] %s288
          %294 = dma.vmem_to_hbm [thread:$0]  %s289, 256, %s287, %s275, 128, 128, 8
        $region36: #{patch_embedding.1} parent=31 // pred_fallthru
          _
      $region32: #{patch_embedding.1} parent=5 // pred_fallthru
        _
      %p295 = scmp.le.s32.totalorder 2, %s12
      // Predicated region
      $region37: #{patch_embedding.1} parent=5 // pred_check
        %p296 = pneg %p295
      $region38: #{patch_embedding.1} parent=5 // pred_check_branch
        %298 = sbr.rel (%p296) target = $region40
      $region39: #{patch_embedding.1} parent=5 // pred_region
        %s299 = ssub.s32 %s12, 2
        // Predicated region
        $region41: #{patch_embedding.1} parent=39 // pred_check
          %p300 = pneg %p109
        $region42: #{patch_embedding.1} parent=39 // pred_check_branch
          %302 = sbr.rel (%p300) target = $region44
        $region43: #{patch_embedding.1} parent=39 // pred_region
          %s303 = sand.u32 %s94, 1
          %s304 = scalar_lea.sflag [#allocation3], %s303
          %s305 = sand.u32 %s94, 1
          %s306 = smul.addr %s305, 16
          %s307 = scalar_lea.vmem [#allocation2], %s306
          %308 = dma.done %s304, 256
        $region44: #{patch_embedding.1} parent=39 // pred_fallthru
          _
      $region40: #{patch_embedding.1} parent=5 // pred_fallthru
        _
    $region6: #{patch_embedding.1} parent=1 // loop_footer
      %s16 = sadd.s32 1, %s12
    $region7: #{patch_embedding.1} parent=1 // loop_footer_branch
      %11 = sbr.rel target = $region3
    $region8: #{patch_embedding.1} parent=1 // loop_exit
      _
    %309 = vsyncpa [#allocation3], 1
    %s310 = scalar_lea.sflag [#allocation3], 1
    %311 = vsyncpa %s310, 1

</llo_original>
